<compile_context>
chip_gen: v7x
topology: tpu7x:2x2x1
jax: 0.10.0
libtpu: 0.0.40
codegen_flags: <defaults>
</compile_context>

<pallas_src>
import jax
import jax.numpy as jnp
from jax.experimental import pallas as pl
from jax.experimental.pallas import tpu as pltpu

NUM_JOINTS = 17
HEATMAP_CH = 33      # FastPose final conv emits 33 channels; narrow(1, 0, 17) keeps 17.
ROWS_PAD = 32        # output-channel rows padded to a sublane-friendly count for the MXU
STRIDE = 4
KH, KW = 3, 3
KWW = 2 * KW         # fused 3x6 window: cols 0..2 = direct pass, cols 3..5 = flip pass

# COCO matched L/R parts (0-indexed): eyes, ears, shoulders, elbows, wrists, hips,
# knees, ankles.
COCO_FLIP_PAIRS = ((1, 2), (3, 4), (5, 6), (7, 8), (9, 10), (11, 12), (13, 14), (15, 16))


def _coco_perm():
    perm = list(range(NUM_JOINTS))
    for a, c in COCO_FLIP_PAIRS:
        perm[a], perm[c] = perm[c], perm[a]
    return perm


# --------------------------------- fused kernel ----------------------------------

def _fused_conv_combine_kernel(p_ref, w_ref, b_ref, o_ref):
    # p_ref: (K, S_tile)        bf16  patches (fused 3x6 window, k = cin*18 + ky*6 + j)
    # w_ref: (ROWS_PAD, K)      bf16  combined weights (direct + shuffled/kx-flipped pass)
    # b_ref: (ROWS_PAD, 1)      f32   combined bias  (b[c] + b[perm[c]])
    # o_ref: (NUM_JOINTS, S_tile) f32 final averaged heatmap tile (spatial on lanes)
    acc = jnp.dot(w_ref[...], p_ref[...], preferred_element_type=jnp.float32)
    o_ref[...] = (acc + b_ref[...])[:NUM_JOINTS, :] * 0.5


# ------------------------------- wrapper-side prep -------------------------------

def _build_patches(x_bf16):
    """Strided-slice 'im2col' for the fused 3x6 / stride-4 window, NCHW-preserving.

    Returns (N, K, S) bf16 with k = cin*18 + ky*6 + j and s = oh*OW + ow.
    Expansion vs x is only 18/16 = 1.125x (stride >= kernel width), there is no flipped
    copy of x (the flip pass is columns 3..5 of the same window) and no transpose.

    TODO(synk): for the real FastPose head (large Cin) move this tap gather in-kernel
    (phase-split x layout + per-tap MXU accumulation into VMEM scratch) so the feature
    map streams exactly once; at 1.125x bf16 the prologue traffic here is already below
    one f32 pass over x.
    """
    N, Cin, H, W = x_bf16.shape
    OH, OW = H // STRIDE, W // STRIDE
    xp = jnp.pad(x_bf16, ((0, 0), (0, 0), (1, 1), (1, 1)))
    taps = []
    for ky in range(KH):
        for j in range(KWW):
            taps.append(xp[:, :,
                           ky: ky + STRIDE * (OH - 1) + 1: STRIDE,
                           j:  j + STRIDE * (OW - 1) + 1: STRIDE])   # (N, Cin, OH, OW)
    p = jnp.stack(taps, axis=2)                                      # (N, Cin, 18, OH, OW)
    return p.reshape(N, Cin * KH * KWW, OH * OW)


def _build_combined_weights(w, b):
    """Fold narrow(17) + shuffleLR + W-flip + the two conv passes into one weight matrix.

    direct pass (window cols 0..2):  w[c,       cin, ky, j]
    flip pass   (window cols 3..5):  w[perm[c], cin, ky, 5 - j]
    bias:                            b[c] + b[perm[c]]
    The permutation / kx reversal happen at f32 before the bf16 cast -> exact.
    """
    Cin = w.shape[1]
    perm = jnp.asarray(_coco_perm())
    wd = w[:NUM_JOINTS]                          # (17, Cin, 3, 3)
    wf = w[perm][:, :, :, ::-1]                  # (17, Cin, 3, 3) shuffled + kx reversed
    wc = jnp.concatenate([wd, wf], axis=3)       # (17, Cin, 3, 6)
    wc = wc.reshape(NUM_JOINTS, Cin * KH * KWW)  # k = cin*18 + ky*6 + j
    wc = jnp.pad(wc, ((0, ROWS_PAD - NUM_JOINTS), (0, 0))).astype(jnp.bfloat16)
    bc = b[:NUM_JOINTS] + b[perm]
    bc = jnp.pad(bc, (0, ROWS_PAD - NUM_JOINTS)).astype(jnp.float32).reshape(ROWS_PAD, 1)
    return wc, bc


def _pick_s_tile(S):
    # Whole image if small; otherwise the largest 128-multiple divisor <= 1024 so the
    # grid tiles exactly (no padded tail / post-kernel slice) and output stores stay
    # full lane width.  ~0.35us per grid step favours big tiles; for real heatmap sizes
    # on v7x re-derive VMEM (64 MiB physical / 32 MiB default scoped) and set
    # vmem_limit_bytes if the per-tile K*S_tile bf16 buffers grow.
    if S <= 1024:
        return S
    for t in (1024, 512, 256, 128):
        if S % t == 0:
            return t
    return S


# ----------------------------------- forward -------------------------------------

def inferennet_forward(x, w, b):
    """(pyranet(x)[:, :17] + flip(shuffleLR(pyranet(flip(x))[:, :17]))) / 2, fully fused.

    TODO(synk): the real pyranet is FastPose('resnet101') (SE-ResNet-101 + DUC blocks +
    final conv) loaded from a .pth checkpoint; a single synthetic 3x3 stride-4 conv
    stands in here, which is what lets the flip pass fold into the combined weights.
    """
    N, Cin, H, W = x.shape
    OH, OW = H // STRIDE, W // STRIDE
    S = OH * OW
    K = Cin * KH * KWW

    patches = _build_patches(x.astype(jnp.bfloat16))          # (N, K, S) bf16
    wc, bc = _build_combined_weights(w.astype(jnp.float32),
                                     b.astype(jnp.float32))   # (32, K) bf16, (32, 1) f32

    s_tile = _pick_s_tile(S)
    assert S % s_tile == 0
    grid = (N, S // s_tile)

    out = pl.pallas_call(
        _fused_conv_combine_kernel,
        out_shape=jax.ShapeDtypeStruct((N, NUM_JOINTS, S), jnp.float32),
        grid_spec=pltpu.PrefetchScalarGridSpec(
            num_scalar_prefetch=0,
            grid=grid,
            in_specs=[
                pl.BlockSpec((pl.Squeezed(), K, s_tile), lambda n, s: (n, 0, s)),
                pl.BlockSpec((ROWS_PAD, K), lambda n, s: (0, 0)),   # VMEM-resident weights
                pl.BlockSpec((ROWS_PAD, 1), lambda n, s: (0, 0)),   # VMEM-resident bias
            ],
            out_specs=pl.BlockSpec((pl.Squeezed(), NUM_JOINTS, s_tile),
                                   lambda n, s: (n, 0, s)),
        ),
        compiler_params=pltpu.CompilerParams(
            dimension_semantics=("parallel", "parallel")),
    )(patches, wc, bc)

    # s was written in (oh, ow) row-major order -> reshape IS the NCHW layout (no transpose).
    return out.reshape(N, NUM_JOINTS, OH, OW)


# ------------------------------------- main ---------------------------------------

if __name__ == "__main__":
    key = jax.random.PRNGKey(0)
    kx, kw, kb = jax.random.split(key, 3)

    N, Cin, H, W = 2, 3, 32, 32                   # small RGB-like input (NCHW)
    x = jax.random.normal(kx, (N, Cin, H, W), dtype=jnp.float32)
    w = jax.random.normal(kw, (HEATMAP_CH, Cin, KH, KW), dtype=jnp.float32) * 0.1
    b = jax.random.normal(kb, (HEATMAP_CH,), dtype=jnp.float32) * 0.1

    y = jax.jit(inferennet_forward)(x, w, b)
    jax.block_until_ready(y)

    # Pure-JAX reference for the same synthetic pyranet, using the same bf16-cast operands
    # as the kernel path (accumulation stays f32 on both sides).
    xr = x.astype(jnp.bfloat16).astype(jnp.float32)
    wr = w.astype(jnp.bfloat16).astype(jnp.float32)

    def ref_pyranet(xx):
        o = jax.lax.conv_general_dilated(
            xx, wr, window_strides=(STRIDE, STRIDE), padding=((1, 1), (1, 1)),
            dimension_numbers=("NCHW", "OIHW", "NCHW"),
            precision=jax.lax.Precision.HIGHEST)
        return o + b[None, :, None, None]

    perm = jnp.asarray(_coco_perm())
    o17 = ref_pyranet(xr)[:, :NUM_JOINTS]
    f17 = ref_pyranet(jnp.flip(xr, axis=3))[:, :NUM_JOINTS]
    f17 = jnp.flip(f17[:, perm], axis=3)          # flip(shuffleLR(flip_out))
    ref = (o17 + f17) / 2

    assert y.shape == (N, NUM_JOINTS, H // STRIDE, W // STRIDE)
    err = float(jnp.max(jnp.abs(y - ref)))
    # Both sides use identical bf16 operand values with f32 accumulation; only the
    # accumulation order differs, so wiring errors (wrong flip/shuffle/narrow) would be O(1).
    assert jnp.allclose(y, ref, atol=1e-2, rtol=1e-2), err
    print("KERNEL_OK")
</pallas_src>

<mosaic_0001>
module attributes {stable_mosaic.version = 11 : i64} {
  func.func @_fused_conv_combine_kernel(%arg0: i32, %arg1: i32, %arg2: memref<1x54x64xbf16, #tpu.memory_space<vmem>>, %arg3: memref<32x54xbf16, #tpu.memory_space<vmem>>, %arg4: memref<32x1xf32, #tpu.memory_space<vmem>>, %arg5: memref<1x17x64xf32, #tpu.memory_space<vmem>>) attributes {dimension_semantics = [#tpu.dimension_semantics<parallel>, #tpu.dimension_semantics<parallel>], iteration_bounds = array<i64: 2, 1>, scalar_prefetch = 0 : i64, scratch_operands = 0 : i64, tpu.core_type = #tpu.core_type<tc>, window_params = [{transform_indices = @transform_0, window_bounds = array<i64: 1, 54, 64>}, {pipeline_mode = #tpu.pipeline_mode<synchronous>, transform_indices = @transform_1, window_bounds = array<i64: 32, 54>}, {pipeline_mode = #tpu.pipeline_mode<synchronous>, transform_indices = @transform_2, window_bounds = array<i64: 32, 1>}, {transform_indices = @transform_3, window_bounds = array<i64: 1, 17, 64>}]} {
    %c0 = arith.constant 0 : index
    %c0_0 = arith.constant 0 : index
    %0 = vector.load %arg3[%c0, %c0_0] : memref<32x54xbf16, #tpu.memory_space<vmem>>, vector<32x54xbf16>
    %c0_1 = arith.constant 0 : index
    %c0_2 = arith.constant 0 : index
    %c0_3 = arith.constant 0 : index
    %1 = vector.load %arg2[%c0_1, %c0_2, %c0_3] : memref<1x54x64xbf16, #tpu.memory_space<vmem>>, vector<1x54x64xbf16>
    %2 = vector.shape_cast %1 : vector<1x54x64xbf16> to vector<54x64xbf16>
    %cst = arith.constant dense<0.000000e+00> : vector<32x64xf32>
    %3 = tpu.matmul %0, %2, %cst {dimension_numbers = #tpu.dot_dimension_numbers<[1], [0], [0], [1], [0, 0, 1, 1], [], []>} : vector<32x54xbf16>, vector<54x64xbf16>, vector<32x64xf32> -> vector<32x64xf32>
    %c0_4 = arith.constant 0 : index
    %c0_5 = arith.constant 0 : index
    %4 = vector.load %arg4[%c0_4, %c0_5] : memref<32x1xf32, #tpu.memory_space<vmem>>, vector<32x1xf32>
    %5 = vector.broadcast %4 : vector<32x1xf32> to vector<32x64xf32>
    %6 = arith.addf %3, %5 : vector<32x64xf32>
    %7 = vector.extract_strided_slice %6 {offsets = [0, 0], sizes = [17, 64], strides = [1, 1]} : vector<32x64xf32> to vector<17x64xf32>
    %cst_6 = arith.constant 5.000000e-01 : f32
    %8 = vector.broadcast %cst_6 : f32 to vector<17x64xf32>
    %9 = arith.mulf %7, %8 : vector<17x64xf32>
    %c0_7 = arith.constant 0 : index
    %c0_8 = arith.constant 0 : index
    %c0_9 = arith.constant 0 : index
    %10 = vector.load %arg5[%c0_7, %c0_8, %c0_9] : memref<1x17x64xf32, #tpu.memory_space<vmem>>, vector<1x17x64xf32>
    %11 = vector.shape_cast %10 : vector<1x17x64xf32> to vector<17x64xf32>
    %12 = vector.shape_cast %9 : vector<17x64xf32> to vector<1x17x64xf32>
    tpu.vector_store %arg5[%c0_7, %c0_8, %c0_9], %12 {strides = array<i32>} : memref<1x17x64xf32, #tpu.memory_space<vmem>>, vector<1x17x64xf32>,
    return
  }
  func.func @transform_0(%arg0: i32, %arg1: i32) -> (i32, i32, i32) {
    %c0_i32 = arith.constant 0 : i32
    %c0_i32_0 = arith.constant 0 : i32
    return %arg0, %c0_i32, %arg1 : i32, i32, i32
  }
  func.func @transform_1(%arg0: i32, %arg1: i32) -> (i32, i32) {
    %c0_i32 = arith.constant 0 : i32
    %c0_i32_0 = arith.constant 0 : i32
    %c0_i32_1 = arith.constant 0 : i32
    return %c0_i32, %c0_i32_0 : i32, i32
  }
  func.func @transform_2(%arg0: i32, %arg1: i32) -> (i32, i32) {
    %c0_i32 = arith.constant 0 : i32
    %c0_i32_0 = arith.constant 0 : i32
    %c0_i32_1 = arith.constant 0 : i32
    return %c0_i32, %c0_i32_0 : i32, i32
  }
  func.func @transform_3(%arg0: i32, %arg1: i32) -> (i32, i32, i32) {
    %c0_i32 = arith.constant 0 : i32
    %c0_i32_0 = arith.constant 0 : i32
    return %arg0, %c0_i32, %arg1 : i32, i32, i32
  }
}

</mosaic_0001>

<llo_original>
// kernel: inferennet_forward.1
$region0: #{inferennet_forward.1}
  #allocation0 [shape = 'u32[]', space=smem, size = 0x4, offset = 0x4, fixed_abs, tag = 'smem constant byte address 0x4 - core index']
  #allocation1 [shape = 'u32[144,128]{1,0:T(1,128)}', space=vmem, size = 0x12000, scoped, tag = 'internal scratch']
  %s0 = inlined_call_operand.vmem [shape: bf16[2,54,64], index: 0, kind: input, shape index: {}]
  %s1 = inlined_call_operand.vmem [shape: bf16[32,54], index: 1, kind: input, shape index: {}]
  %s2 = inlined_call_operand.vmem [shape: f32[32,1], index: 2, kind: input, shape index: {}]
  %s3 = inlined_call_operand.vmem [shape: f32[2,17,64], index: 3, kind: output, shape index: {}]
  %s4 = sld [smem:[#allocation0]]
  $region45: #{inferennet_forward.1} parent=0
    _
  %s6 = ssub.s32 1, %s4
  %s7 = scalar_select 0, %s6, %s4
  loop: start=0, step=1, limit=4
  $region2: #{inferennet_forward.1} parent=0 // loop_pre_header
    _
  $region3: #{inferennet_forward.1} parent=0 // loop_header
    %s9 = sphi 0, %s13
    %p10 = scmp.ge.s32.totalorder %s9, 4
    %s16 = sphi 0, %s28
    %s17 = sphi 0, %s24
    %s18 = sphi 0, %s16
    %s19 = sphi 0, %s17
    %s20 = sphi 0, %s18
    %s21 = sphi 0, %s19
    %s33 = sphi 0, %s35
    %s36 = sphi 0, %s33
    %s37 = sphi 0, %s36
    %s53 = sphi 0, %s37
    %s57 = sphi 0, %s57
    %s59 = sphi 0, %s57
    %s60 = sphi 0, %s59
    %s74 = sphi 0, %s60
    %s78 = sphi 0, %s78
    %s80 = sphi 0, %s78
    %s81 = sphi 0, %s80
    %s95 = sphi 0, %s81
    %s103 = sphi 0, %s105
    %s106 = sphi 0, %s103
    %s107 = sphi 0, %s106
    %s123 = sphi 0, %s107
  $region4: #{inferennet_forward.1} parent=0 // loop_header_branch
    %12 = sbr.rel (%p10) target = $region8
  $region5: #{inferennet_forward.1} parent=0 // loop_body
    %s14 = ssub.s32 %s9, 1
    %s15 = ssub.s32 %s9, 2
    %s22 = sadd.s32 1, %s17
    %p23 = scmp.ge.s32.totalorder %s22, 1
    %s24 = scalar_select %p23, 0, %s22
    %s25 = sadd.s32 1, %s16
    %s26 = scalar_select %p23, %s25, %s16
    %p27 = scmp.ge.s32.totalorder %s26, 2
    %s28 = scalar_select %p27, 0, %s26
    %s29 = ssub.s32 %s16, %s28
    %s30 = ssub.s32 %s17, %s24
    %s31 = sor.u32 %s29, %s30
    %p32 = scmp.eq.s32.totalorder %s31, 0
    %s34 = sadd.s32 %s33, 1
    %s35 = scalar_select %p32, %s33, %s34
    %p38 = pneg %p32
    %p39 = scmp.eq.s32.totalorder %s9, 1
    %p40 = por %p38, %p39
    %p41 = scmp.ne.s32.totalorder %s33, %s36
    %p42 = scmp.eq.s32.totalorder %s9, 0
    %p43 = por %p41, %p42
    %p44 = scmp.ne.s32.totalorder %s33, %s36
    %p45 = scmp.eq.s32.totalorder %s14, 1
    %p46 = por %p44, %p45
    %p47 = scmp.ne.s32.totalorder %s36, %s37
    %p48 = scmp.eq.s32.totalorder %s14, 0
    %p49 = por %p47, %p48
    %p50 = scmp.ne.s32.totalorder %s36, %s37
    %p51 = scmp.eq.s32.totalorder %s15, 1
    %p52 = por %p50, %p51
    %p54 = scmp.ne.s32.totalorder %s37, %s53
    %p55 = scmp.eq.s32.totalorder %s15, 0
    %p56 = por %p54, %p55
    %s58 = sadd.s32 %s57, 1
    %p61 = scmp.eq.s32.totalorder %s9, 1
    %p62 = scmp.ne.s32.totalorder %s57, %s59
    %p63 = scmp.eq.s32.totalorder %s9, 0
    %p64 = por %p62, %p63
    %p65 = scmp.ne.s32.totalorder %s57, %s59
    %p66 = scmp.eq.s32.totalorder %s14, 1
    %p67 = por %p65, %p66
    %p68 = scmp.ne.s32.totalorder %s59, %s60
    %p69 = scmp.eq.s32.totalorder %s14, 0
    %p70 = por %p68, %p69
    %p71 = scmp.ne.s32.totalorder %s59, %s60
    %p72 = scmp.eq.s32.totalorder %s15, 1
    %p73 = por %p71, %p72
    %p75 = scmp.ne.s32.totalorder %s60, %s74
    %p76 = scmp.eq.s32.totalorder %s15, 0
    %p77 = por %p75, %p76
    %s79 = sadd.s32 %s78, 1
    %p82 = scmp.eq.s32.totalorder %s9, 1
    %p83 = scmp.ne.s32.totalorder %s78, %s80
    %p84 = scmp.eq.s32.totalorder %s9, 0
    %p85 = por %p83, %p84
    %p86 = scmp.ne.s32.totalorder %s78, %s80
    %p87 = scmp.eq.s32.totalorder %s14, 1
    %p88 = por %p86, %p87
    %p89 = scmp.ne.s32.totalorder %s80, %s81
    %p90 = scmp.eq.s32.totalorder %s14, 0
    %p91 = por %p89, %p90
    %p92 = scmp.ne.s32.totalorder %s80, %s81
    %p93 = scmp.eq.s32.totalorder %s15, 1
    %p94 = por %p92, %p93
    %p96 = scmp.ne.s32.totalorder %s81, %s95
    %p97 = scmp.eq.s32.totalorder %s15, 0
    %p98 = por %p96, %p97
    %s99 = ssub.s32 %s16, %s28
    %s100 = ssub.s32 %s17, %s24
    %s101 = sor.u32 %s99, %s100
    %p102 = scmp.eq.s32.totalorder %s101, 0
    %s104 = sadd.s32 %s103, 1
    %s105 = scalar_select %p102, %s103, %s104
    %p108 = pneg %p102
    %p109 = scmp.eq.s32.totalorder %s9, 1
    %p110 = por %p108, %p109
    %p111 = scmp.ne.s32.totalorder %s103, %s106
    %p112 = scmp.eq.s32.totalorder %s9, 0
    %p113 = por %p111, %p112
    %p114 = scmp.ne.s32.totalorder %s103, %s106
    %p115 = scmp.eq.s32.totalorder %s14, 1
    %p116 = por %p114, %p115
    %p117 = scmp.ne.s32.totalorder %s106, %s107
    %p118 = scmp.eq.s32.totalorder %s14, 0
    %p119 = por %p117, %p118
    %p120 = scmp.ne.s32.totalorder %s106, %s107
    %p121 = scmp.eq.s32.totalorder %s15, 1
    %p122 = por %p120, %p121
    %p124 = scmp.ne.s32.totalorder %s107, %s123
    %p125 = scmp.eq.s32.totalorder %s15, 0
    %p126 = por %p124, %p125
    %p127 = scmp.le.s32.totalorder 1, %s9
    %p128 = scmp.lt.s32.totalorder %s9, 3
    %p129 = pnand %p127, %p128
    %p130 = pneg %p129
    // Predicated region
    $region9: #{inferennet_forward.1} parent=5 // pred_check
      _
    $region10: #{inferennet_forward.1} parent=5 // pred_check_branch
      %132 = sbr.rel (%p129) target = $region12
    $region11: #{inferennet_forward.1} parent=5 // pred_region
      %s133 = ssub.s32 %s9, 1
      // Predicated region
      $region13: #{inferennet_forward.1} parent=11 // pred_check
        %p134 = pneg %p70
      $region14: #{inferennet_forward.1} parent=11 // pred_check_branch
        %136 = sbr.rel (%p134) target = $region16
      $region15: #{inferennet_forward.1} parent=11 // pred_region
        _
      $region16: #{inferennet_forward.1} parent=11 // pred_fallthru
        _
      // Predicated region
      $region17: #{inferennet_forward.1} parent=11 // pred_check
        %p137 = pneg %p91
      $region18: #{inferennet_forward.1} parent=11 // pred_check_branch
        %139 = sbr.rel (%p137) target = $region20
      $region19: #{inferennet_forward.1} parent=11 // pred_region
        _
      $region20: #{inferennet_forward.1} parent=11 // pred_fallthru
        _
    $region12: #{inferennet_forward.1} parent=5 // pred_fallthru
      _
    %p140 = scmp.lt.s32.totalorder %s9, 2
    // Predicated region
    $region21: #{inferennet_forward.1} parent=5 // pred_check
      %p141 = pneg %p140
    $region22: #{inferennet_forward.1} parent=5 // pred_check_branch
      %143 = sbr.rel (%p141) target = $region24
    $region23: #{inferennet_forward.1} parent=5 // pred_region
      // Predicated region
      $region25: #{inferennet_forward.1} parent=23 // pred_check
        %p144 = pneg %p43
      $region26: #{inferennet_forward.1} parent=23 // pred_check_branch
        %146 = sbr.rel (%p144) target = $region28
      $region27: #{inferennet_forward.1} parent=23 // pred_region
        %p147 = scmp.lt.s32.totalorder %s16, 1
        %s148 = scalar_select %p147, %s16, 1
        %p149 = scmp.lt.s32.totalorder %s17, 0
        %s150 = scalar_select %p149, %s17, 0
        %s151 = smul.addr %s148, 7
        %s152 = sadd.s32 %s150, %s151
        %s153 = smul.addr %s152, 4
        %s154 = scalar_lea.vmem %s0, %s153
      $region28: #{inferennet_forward.1} parent=23 // pred_fallthru
        _
    $region24: #{inferennet_forward.1} parent=5 // pred_fallthru
      _
    %p155 = scmp.le.s32.totalorder 1, %s9
    %p156 = scmp.lt.s32.totalorder %s9, 3
    %p157 = pnand %p155, %p156
    %p158 = pneg %p157
    // Predicated region
    $region29: #{inferennet_forward.1} parent=5 // pred_check
      _
    $region30: #{inferennet_forward.1} parent=5 // pred_check_branch
      %160 = sbr.rel (%p157) target = $region32
    $region31: #{inferennet_forward.1} parent=5 // pred_region
      %s161 = ssub.s32 %s9, 1
      %p162 = scmp.lt.s32.totalorder %s18, 1
      %s163 = scalar_select %p162, %s18, 1
      %p164 = scmp.lt.s32.totalorder %s19, 0
      %s165 = scalar_select %p164, %s19, 0
      %s166 = smul.addr %s163, 7
      %s167 = sadd.s32 %s165, %s166
      %s168 = smul.addr %s167, 4
      %s169 = scalar_lea.vmem %s0, %s168
      %p170 = pneg %p49
      %p171 = pneg %p46
      %p172 = pneg %p70
      %p173 = pneg %p67
      %p174 = pneg %p91
      %p175 = pneg %p88
      %p176 = pneg %p119
      %p177 = pneg %p116
      %p178 = scmp.lt.s32.totalorder %s18, 1
      %s179 = scalar_select %p178, %s18, 1
      %p180 = scmp.lt.s32.totalorder %s19, 0
      %s181 = scalar_select %p180, %s19, 0
      %s182 = smul.addr %s179, 3
      %s183 = sadd.s32 %s181, %s182
      %s184 = smul.addr %s183, 8
      %s185 = scalar_lea.vmem %s3, %s184
      %p186 = scmp.lt.s32.totalorder %s18, 1
      %s187 = scalar_select %p186, %s18, 1
      %p188 = scmp.lt.s32.totalorder %s19, 0
      %s189 = scalar_select %p188, %s19, 0
      %s190 = smul.addr %s187, 7
      %s191 = sadd.s32 %s189, %s190
      %s192 = smul.addr %s191, 4
      %s193 = scalar_lea.vmem %s0, %s192
      %p194 = scmp.lt.s32.totalorder %s18, 1
      %s195 = scalar_select %p194, %s18, 1
      %p196 = scmp.lt.s32.totalorder %s19, 0
      %s197 = scalar_select %p196, %s19, 0
      %s198 = smul.addr %s195, 3
      %s199 = sadd.s32 %s197, %s198
      %s200 = smul.addr %s199, 8
      %s201 = scalar_lea.vmem %s3, %s200
      %v203 = vld [vmem:[%s1] sm:$0xf]
      %v204 = vld [vmem:[%s1 + $0x4] sm:$0xf]
      %v205 = vld [vmem:[%s1 + $0x8] sm:$0xf]
      %v206 = vld [vmem:[%s1 + $0xc] sm:$0xf]
      %v207 = vld [vmem:[%s193] sm:$0xf]
      %v208 = vld [vmem:[%s193 + $0x4] sm:$0xf]
      %v209 = vld [vmem:[%s193 + $0x8] sm:$0xf]
      %v210 = vld [vmem:[%s193 + $0xc] sm:$0xf]
      %v211 = vld [vmem:[%s193 + $0x10] sm:$0xf]
      %v212 = vld [vmem:[%s193 + $0x14] sm:$0xf]
      %v213 = vld [vmem:[%s193 + $0x18] sm:$0x7]
      %v214 = vld [vmem:[%s2] sm:$0xff]
      %v215 = vld [vmem:[%s2 + $0x8] sm:$0xff]
      %v216 = vld [vmem:[%s2 + $0x10] sm:$0xff]
      %v217 = vld [vmem:[%s2 + $0x18] sm:$0xff]
      %219 = vset.pattern.permute.xlu0 0
      %220 = vperm.xlu0 %219, %v214
      %v221 = vpop.permute.xlu0 %220
      %224 = vset.pattern.permute.xlu0 0
      %225 = vperm.xlu0 %224, %v215
      %v226 = vpop.permute.xlu0 %225
      %229 = vset.pattern.permute.xlu0 0
      %230 = vperm.xlu0 %229, %v216
      %v231 = vpop.permute.xlu0 %230
      %234 = vset.pattern.permute.xlu0 0
      %235 = vperm.xlu0 %234, %v217
      %v236 = vpop.permute.xlu0 %235
      %v241 = vunpack.c.l.b16 %v203
      %v242 = vunpack.c.l.b16 %v204
      %v243 = vunpack.c.l.b16 %v205
      %v244 = vunpack.c.l.b16 %v206
      %v245 = vpack.c.b16 %v242, %v241
      %v246 = vpack.c.b16 %v244, %v243
      %v254 = vunpack.c.l.b16 %v207
      %v255 = vunpack.c.l.b16 %v208
      %v256 = vunpack.c.l.b16 %v209
      %v257 = vunpack.c.l.b16 %v210
      %v258 = vunpack.c.l.b16 %v211
      %v259 = vunpack.c.l.b16 %v212
      %v260 = vunpack.c.l.b16 %v213
      %v261 = vpack.c.b16 %v255, %v254
      %v262 = vpack.c.b16 %v257, %v256
      %v263 = vpack.c.b16 %v259, %v258
      %v264 = vpack.c.b16 %v260, %v260
      %vm268 = vcmask 441344
      %v270 = vsel %vm268, %v245, 0
      %v273 = vsel %vm268, %v246, 0
      %vm275 = vcmask 1042432
      %v277 = vsel %vm275, %v264, 0
      %279 = vmatprep.subr.bf16.mxu0 0
      %280 = vmatpush1.bf16.msra.mxu0 %v261
      %281 = vmatprep.subr.bf16.mxu0 0
      %282 = vmatpush1.bf16.msra.mxu0 %v262
      %283 = vmatprep.subr.bf16.mxu0 0
      %284 = vmatpush1.bf16.msra.mxu0 %v263
      %285 = vmatprep.subr.bf16.mxu0 0
      %286 = vmatpush1.bf16.msra.mxu0 %v277
      %287 = vmatprep.subr.bf16.mxu0 0
      %288 = vmatpush1.bf16.msra.mxu0 0
      %289 = vmatprep.subr.bf16.mxu0 0
      %290 = vmatpush1.bf16.msra.mxu0 0
      %291 = vmatprep.subr.bf16.mxu0 0
      %292 = vmatpush1.bf16.msra.mxu0 0
      %293 = vmatprep.subr.bf16.mxu0 0
      %294 = vmatpush1.bf16.msra.mxu0 0
      %295 = vmatprep.subr.bf16.mxu0 0
      %296 = vmatpush1.bf16.msra.mxu0 0
      %297 = vmatprep.subr.bf16.mxu0 0
      %298 = vmatpush1.bf16.msra.mxu0 0
      %299 = vmatprep.subr.bf16.mxu0 0
      %300 = vmatpush1.bf16.msra.mxu0 0
      %301 = vmatprep.subr.bf16.mxu0 0
      %302 = vmatpush1.bf16.msra.mxu0 0
      %303 = vmatprep.subr.bf16.mxu0 0
      %304 = vmatpush1.bf16.msra.mxu0 0
      %305 = vmatprep.subr.bf16.mxu0 0
      %306 = vmatpush1.bf16.msra.mxu0 0
      %307 = vmatprep.subr.bf16.mxu0 0
      %308 = vmatpush1.bf16.msra.mxu0 0
      %309 = vmatprep.subr.bf16.mxu0 0
      %310 = vmatpush1.bf16.msra.mxu0 0
      %311 = vmatprep.mubr.bf16.mxu0 0
      %312 = vmatmul.mubr.bf16.gmra.mrb[0].mxu0 %v270
      %v313 = vpop.f32.mrb[0].mxu0
      %v314 = vadd.f32 %v221, %v313
      %v315 = vpop.f32.mrb[0].mxu0
      %v316 = vpop.f32.mrb[0].mxu0
      %v317 = vadd.f32 %v226, %v316
      %v318 = vpop.f32.mrb[0].mxu0
      %319 = vmatprep.mubr.bf16.mxu0 0
      %320 = vmatmul.mubr.bf16.gmra.mrb[0].mxu0 %v273
      %v321 = vpop.f32.mrb[0].mxu0
      %v322 = vadd.f32 %v231, %v321
      %v323 = vpop.f32.mrb[0].mxu0
      %v324 = vpop.f32.mrb[0].mxu0
      %v325 = vpop.f32.mrb[0].mxu0
      %326 = vdwg.mxu0
      %v327 = vmul.f32 %v314, 0.5
      %v328 = vmul.f32 %v317, 0.5
      %v329 = vmul.f32 %v322, 0.5
      %vm330 = vcmask 523264
      %331 = vst.msk [vmem:[%s201] sm:$0xff] %vm330, %v327
      %332 = vst.msk [vmem:[%s201 + $0x8] sm:$0xff] %vm330, %v328
      %vm333 = vcmask 516096
      %334 = vst.msk [vmem:[%s201 + $0x10] sm:$0x1] %vm333, %v329
      %p335 = scmp.lt.s32.totalorder %s18, 1
      %s336 = scalar_select %p335, %s18, 1
      %p337 = scmp.lt.s32.totalorder %s19, 0
      %s338 = scalar_select %p337, %s19, 0
      %s339 = smul.addr %s336, 3
      %s340 = sadd.s32 %s338, %s339
      %s341 = smul.addr %s340, 8
      %s342 = scalar_lea.vmem %s3, %s341
      // Predicated region
      $region33: #{inferennet_forward.1} parent=31 // pred_check
        %p343 = pneg %p116
      $region34: #{inferennet_forward.1} parent=31 // pred_check_branch
        %345 = sbr.rel (%p343) target = $region36
      $region35: #{inferennet_forward.1} parent=31 // pred_region
        _
      $region36: #{inferennet_forward.1} parent=31 // pred_fallthru
        _
    $region32: #{inferennet_forward.1} parent=5 // pred_fallthru
      _
    %p346 = scmp.le.s32.totalorder 2, %s9
    // Predicated region
    $region37: #{inferennet_forward.1} parent=5 // pred_check
      %p347 = pneg %p346
    $region38: #{inferennet_forward.1} parent=5 // pred_check_branch
      %349 = sbr.rel (%p347) target = $region40
    $region39: #{inferennet_forward.1} parent=5 // pred_region
      %s350 = ssub.s32 %s9, 2
      // Predicated region
      $region41: #{inferennet_forward.1} parent=39 // pred_check
        %p351 = pneg %p122
      $region42: #{inferennet_forward.1} parent=39 // pred_check_branch
        %353 = sbr.rel (%p351) target = $region44
      $region43: #{inferennet_forward.1} parent=39 // pred_region
        %p354 = scmp.lt.s32.totalorder %s20, 1
        %s355 = scalar_select %p354, %s20, 1
        %p356 = scmp.lt.s32.totalorder %s21, 0
        %s357 = scalar_select %p356, %s21, 0
        %s358 = smul.addr %s355, 3
        %s359 = sadd.s32 %s357, %s358
        %s360 = smul.addr %s359, 8
        %s361 = scalar_lea.vmem %s3, %s360
      $region44: #{inferennet_forward.1} parent=39 // pred_fallthru
        _
    $region40: #{inferennet_forward.1} parent=5 // pred_fallthru
      _
  $region6: #{inferennet_forward.1} parent=0 // loop_footer
    %s13 = sadd.s32 1, %s9
  $region7: #{inferennet_forward.1} parent=0 // loop_footer_branch
    %8 = sbr.rel target = $region3
  $region8: #{inferennet_forward.1} parent=0 // loop_exit
    _

</llo_original>
